<compile_context>
chip_gen: v6e
topology: v6e:2x2x1
jax: 0.10.0
libtpu: 0.0.40
codegen_flags: <defaults>
</compile_context>

<pallas_src>
import functools

import jax
import jax.numpy as jnp
from jax.experimental import pallas as pl
from jax.experimental.pallas import tpu as pltpu


def _round_up(x, m):
    return ((x + m - 1) // m) * m


def _proj_logsoftmax_kernel(x_ref, w_ref, b_ref, o_ref, m_ref, l_ref, *, nv, tn):
    # x_ref: (tm, D)   bf16/f32   VMEM
    # w_ref: (D, tn)   bf16/f32   VMEM   (one vocab tile of the weight)
    # b_ref: (1, tn)   f32        VMEM
    # o_ref: (tm, V)   f32        VMEM   (resident across the vocab grid axis)
    # m_ref, l_ref: (tm, 1) f32 scratch  (running max / running sum-exp)
    j = pl.program_id(1)

    @pl.when(j == 0)
    def _init():
        m_ref[...] = jnp.full_like(m_ref, -jnp.inf)
        l_ref[...] = jnp.zeros_like(l_ref)

    # MXU matmul with f32 accumulation; bias add in f32.
    logits = jnp.dot(x_ref[...], w_ref[...], preferred_element_type=jnp.float32)
    logits = logits + b_ref[...]                     # (tm, tn) f32

    # Stash the raw logits of this vocab tile into the resident (tm, V)
    # output block.  Static, 128-aligned column slices (one pl.when per tile,
    # only the matching branch runs) keep every store lane-dense and avoid
    # dynamic lane-offset stores.
    for jj in range(nv):
        @pl.when(j == jj)
        def _store(jj=jj):
            o_ref[:, jj * tn:(jj + 1) * tn] = logits

    # Online max / sum-exp across vocab tiles (all f32).
    m_prev = m_ref[...]
    m_new = jnp.maximum(m_prev, jnp.max(logits, axis=-1, keepdims=True))
    l_ref[...] = l_ref[...] * jnp.exp(m_prev - m_new) + jnp.sum(
        jnp.exp(logits - m_new), axis=-1, keepdims=True
    )
    m_ref[...] = m_new

    @pl.when(j == nv - 1)
    def _finalize():
        lse = m_ref[...] + jnp.log(l_ref[...])
        o_ref[...] = o_ref[...] - lse                # log_softmax = logits - lse


@functools.partial(jax.jit, static_argnames=("tm", "tn", "use_bf16"))
def projection_layer(x, w_t, b, *, tm=None, tn=None, use_bf16=True):
    """log_softmax(x @ w_t + b, axis=-1).

    x: (B, S, D); w_t: (D, V) (transposed nn.Linear weight); b: (V,).
    Returns (B, S, V) float32.
    """
    B, S, D = x.shape
    V = w_t.shape[1]
    M = B * S

    # Vocab tile: largest 128-multiple (<= 2048) dividing V, else full V.
    if tn is None:
        tn = next((c for c in (2048, 1024, 512, 256, 128) if V % c == 0), V)
    nv = V // tn if V % tn == 0 else 1
    if nv == 1:
        tn = V

    # Row tile: as large as a ~24 MiB budget for the (double-buffered)
    # resident f32 output row tile allows, capped at 512 and at padded M.
    if tm is None:
        budget = 24 * 1024 * 1024
        tm = min(512, max(16, budget // (2 * 4 * V)))
    tm = min(tm, _round_up(M, 16))
    tm = max(16, (tm // 16) * 16)        # sublane / bf16-packing friendly
    M_pad = _round_up(M, tm)

    compute_dtype = jnp.bfloat16 if use_bf16 else x.dtype
    x2 = x.reshape(M, D)
    if M_pad != M:
        x2 = jnp.pad(x2, ((0, M_pad - M), (0, 0)))
    x2 = x2.astype(compute_dtype)
    w_c = w_t.astype(compute_dtype)
    b2 = b.reshape(1, V).astype(jnp.float32)

    # Rough double-buffered VMEM estimate -> raise the scoped-VMEM limit,
    # but stay under v7x's 64 MiB/TC physical capacity.
    est = (
        2 * tm * D * x2.dtype.itemsize
        + 2 * D * tn * w_c.dtype.itemsize
        + 2 * tn * 4
        + 2 * tm * V * 4
        + 4 * tm * 4
    )
    vmem_limit = int(min(max(2 * est, 32 * 1024 * 1024), 56 * 1024 * 1024))

    grid = (M_pad // tm, nv)
    kernel = functools.partial(_proj_logsoftmax_kernel, nv=nv, tn=tn)

    # TODO(synk): for very large d_model, add a K-tiling grid axis with an f32
    # accumulator so the (tm, D) / (D, tn) blocks stay bounded in VMEM.
    out2 = pl.pallas_call(
        kernel,
        out_shape=jax.ShapeDtypeStruct((M_pad, V), jnp.float32),
        grid=grid,
        in_specs=[
            pl.BlockSpec((tm, D), lambda i, j: (i, 0)),   # row tile of x
            pl.BlockSpec((D, tn), lambda i, j: (0, j)),   # vocab tile of W
            pl.BlockSpec((1, tn), lambda i, j: (0, j)),   # vocab tile of bias
        ],
        # Resident f32 row tile; written back to HBM once per row block.
        out_specs=pl.BlockSpec((tm, V), lambda i, j: (i, 0)),
        scratch_shapes=[
            pltpu.VMEM((tm, 1), jnp.float32),   # running max
            pltpu.VMEM((tm, 1), jnp.float32),   # running sum-exp
        ],
        compiler_params=pltpu.CompilerParams(
            dimension_semantics=("parallel", "arbitrary"),
            vmem_limit_bytes=vmem_limit,
        ),
    )(x2, w_c, b2)

    return out2[:M].reshape(B, S, V)


if __name__ == "__main__":
    key = jax.random.PRNGKey(0)
    k = jax.random.split(key, 6)

    # --- Config 1: d_model=32, vocab=128, batch=2, seq=8 -------------------
    d_model, vocab_size, batch, seq = 32, 128, 2, 8
    x = jax.random.normal(k[0], (batch, seq, d_model), dtype=jnp.float32)
    # PyTorch nn.Linear weight layout is (vocab, d_model); transpose for the
    # kernel's (D, V) layout.
    w = jax.random.normal(k[1], (vocab_size, d_model), dtype=jnp.float32) / jnp.sqrt(d_model)
    b = jax.random.normal(k[2], (vocab_size,), dtype=jnp.float32) * 0.01

    out = jax.block_until_ready(projection_layer(x, w.T, b))
    assert out.shape == (batch, seq, vocab_size)

    # Tight check vs. a reference using the same bf16 matmul inputs + f32 acc.
    ref_bf16 = jax.nn.log_softmax(
        jnp.einsum("bsd,vd->bsv", x.astype(jnp.bfloat16), w.astype(jnp.bfloat16),
                   preferred_element_type=jnp.float32) + b, axis=-1)
    assert jnp.allclose(out, ref_bf16, atol=1e-3, rtol=1e-3)

    # Looser check vs. the pure-f32 module semantics (bf16 matmul rounding).
    ref_f32 = jax.nn.log_softmax(jnp.einsum("bsd,vd->bsv", x, w) + b, axis=-1)
    assert jnp.allclose(out, ref_f32, atol=5e-2)

    # --- Config 2: non-divisible rows (padding path) + multiple vocab tiles -
    d2, v2, batch2, seq2 = 48, 384, 2, 7
    x_2 = jax.random.normal(k[3], (batch2, seq2, d2), dtype=jnp.float32)
    w_2 = jax.random.normal(k[4], (v2, d2), dtype=jnp.float32) / jnp.sqrt(d2)
    b_2 = jax.random.normal(k[5], (v2,), dtype=jnp.float32) * 0.01

    out_2 = jax.block_until_ready(projection_layer(x_2, w_2.T, b_2))
    ref_2 = jax.nn.log_softmax(
        jnp.einsum("bsd,vd->bsv", x_2.astype(jnp.bfloat16), w_2.astype(jnp.bfloat16),
                   preferred_element_type=jnp.float32) + b_2, axis=-1)
    assert out_2.shape == (batch2, seq2, v2)
    assert jnp.allclose(out_2, ref_2, atol=1e-3, rtol=1e-3)

    print("KERNEL_OK")
</pallas_src>

<mosaic_0001>
module attributes {stable_mosaic.version = 11 : i64} {
  func.func @_proj_logsoftmax_kernel(%arg0: i32, %arg1: i32, %arg2: memref<16x32xbf16, #tpu.memory_space<vmem>>, %arg3: memref<32x128xbf16, #tpu.memory_space<vmem>>, %arg4: memref<1x128xf32, #tpu.memory_space<vmem>>, %arg5: memref<16x128xf32, #tpu.memory_space<vmem>>, %arg6: memref<16x1xf32, #tpu.memory_space<vmem>>, %arg7: memref<16x1xf32, #tpu.memory_space<vmem>>) attributes {dimension_semantics = [#tpu.dimension_semantics<parallel>, #tpu.dimension_semantics<arbitrary>], iteration_bounds = array<i64: 1, 1>, scalar_prefetch = 0 : i64, scratch_operands = 2 : i64, tpu.core_type = #tpu.core_type<tc>, window_params = [{transform_indices = @transform_0, window_bounds = array<i64: 16, 32>}, {transform_indices = @transform_1, window_bounds = array<i64: 32, 128>}, {transform_indices = @transform_2, window_bounds = array<i64: 1, 128>}, {transform_indices = @transform_3, window_bounds = array<i64: 16, 128>}]} {
    %c0_i32 = arith.constant 0 : i32
    %0 = arith.cmpi eq, %arg1, %c0_i32 : i32
    %1 = arith.extui %0 : i1 to i32
    %c0_i32_0 = arith.constant 0 : i32
    %2 = arith.cmpi ne, %1, %c0_i32_0 : i32
    scf.if %2 {
      %cst_20 = arith.constant 0xFF800000 : f32
      %31 = vector.broadcast %cst_20 : f32 to vector<16x1xf32>
      %c0_21 = arith.constant 0 : index
      %c0_22 = arith.constant 0 : index
      %32 = vector.load %arg6[%c0_21, %c0_22] : memref<16x1xf32, #tpu.memory_space<vmem>>, vector<16x1xf32>
      tpu.vector_store %arg6[%c0_21, %c0_22], %31 {strides = array<i32>} : memref<16x1xf32, #tpu.memory_space<vmem>>, vector<16x1xf32>,
      %cst_23 = arith.constant 0.000000e+00 : f32
      %33 = vector.broadcast %cst_23 : f32 to vector<16x1xf32>
      %c0_24 = arith.constant 0 : index
      %c0_25 = arith.constant 0 : index
      %34 = vector.load %arg7[%c0_24, %c0_25] : memref<16x1xf32, #tpu.memory_space<vmem>>, vector<16x1xf32>
      tpu.vector_store %arg7[%c0_24, %c0_25], %33 {strides = array<i32>} : memref<16x1xf32, #tpu.memory_space<vmem>>, vector<16x1xf32>,
    } else {
    }
    %c0 = arith.constant 0 : index
    %c0_1 = arith.constant 0 : index
    %3 = vector.load %arg2[%c0, %c0_1] : memref<16x32xbf16, #tpu.memory_space<vmem>>, vector<16x32xbf16>
    %c0_2 = arith.constant 0 : index
    %c0_3 = arith.constant 0 : index
    %4 = vector.load %arg3[%c0_2, %c0_3] : memref<32x128xbf16, #tpu.memory_space<vmem>>, vector<32x128xbf16>
    %cst = arith.constant dense<0.000000e+00> : vector<16x128xf32>
    %5 = tpu.matmul %3, %4, %cst {dimension_numbers = #tpu.dot_dimension_numbers<[1], [0], [0], [1], [0, 0, 1, 1], [], []>} : vector<16x32xbf16>, vector<32x128xbf16>, vector<16x128xf32> -> vector<16x128xf32>
    %c0_4 = arith.constant 0 : index
    %c0_5 = arith.constant 0 : index
    %6 = vector.load %arg4[%c0_4, %c0_5] : memref<1x128xf32, #tpu.memory_space<vmem>>, vector<1x128xf32>
    %7 = vector.broadcast %6 : vector<1x128xf32> to vector<16x128xf32>
    %8 = arith.addf %5, %7 : vector<16x128xf32>
    %c0_i32_6 = arith.constant 0 : i32
    %9 = arith.cmpi eq, %arg1, %c0_i32_6 : i32
    %10 = arith.extui %9 : i1 to i32
    %c0_i32_7 = arith.constant 0 : i32
    %11 = arith.cmpi ne, %10, %c0_i32_7 : i32
    scf.if %11 {
      %c0_20 = arith.constant 0 : index
      %c0_21 = arith.constant 0 : index
      %31 = vector.load %arg5[%c0_20, %c0_21] : memref<16x128xf32, #tpu.memory_space<vmem>>, vector<16x128xf32>
      tpu.vector_store %arg5[%c0_20, %c0_21], %8 {strides = array<i32>} : memref<16x128xf32, #tpu.memory_space<vmem>>, vector<16x128xf32>,
    } else {
    }
    %c0_8 = arith.constant 0 : index
    %c0_9 = arith.constant 0 : index
    %12 = vector.load %arg6[%c0_8, %c0_9] : memref<16x1xf32, #tpu.memory_space<vmem>>, vector<16x1xf32>
    %cst_10 = arith.constant dense<0xFF800000> : vector<16xf32>
    %13 = vector.multi_reduction <maximumf>, %8, %cst_10 [1] : vector<16x128xf32> to vector<16xf32>
    %14 = vector.shape_cast %13 : vector<16xf32> to vector<16x1xf32>
    %15 = arith.maximumf %12, %14 : vector<16x1xf32>
    %c0_11 = arith.constant 0 : index
    %c0_12 = arith.constant 0 : index
    %16 = vector.load %arg7[%c0_11, %c0_12] : memref<16x1xf32, #tpu.memory_space<vmem>>, vector<16x1xf32>
    %17 = arith.subf %12, %15 : vector<16x1xf32>
    %18 = math.exp %17 : vector<16x1xf32>
    %19 = arith.mulf %16, %18 : vector<16x1xf32>
    %20 = vector.broadcast %15 : vector<16x1xf32> to vector<16x128xf32>
    %21 = arith.subf %8, %20 : vector<16x128xf32>
    %22 = math.exp %21 : vector<16x128xf32>
    %cst_13 = arith.constant dense<0.000000e+00> : vector<16xf32>
    %23 = vector.multi_reduction <add>, %22, %cst_13 [1] : vector<16x128xf32> to vector<16xf32>
    %24 = vector.shape_cast %23 : vector<16xf32> to vector<16x1xf32>
    %25 = arith.addf %19, %24 : vector<16x1xf32>
    %c0_14 = arith.constant 0 : index
    %c0_15 = arith.constant 0 : index
    %26 = vector.load %arg7[%c0_14, %c0_15] : memref<16x1xf32, #tpu.memory_space<vmem>>, vector<16x1xf32>
    tpu.vector_store %arg7[%c0_14, %c0_15], %25 {strides = array<i32>} : memref<16x1xf32, #tpu.memory_space<vmem>>, vector<16x1xf32>,
    %c0_16 = arith.constant 0 : index
    %c0_17 = arith.constant 0 : index
    %27 = vector.load %arg6[%c0_16, %c0_17] : memref<16x1xf32, #tpu.memory_space<vmem>>, vector<16x1xf32>
    tpu.vector_store %arg6[%c0_16, %c0_17], %15 {strides = array<i32>} : memref<16x1xf32, #tpu.memory_space<vmem>>, vector<16x1xf32>,
    %c0_i32_18 = arith.constant 0 : i32
    %28 = arith.cmpi eq, %arg1, %c0_i32_18 : i32
    %29 = arith.extui %28 : i1 to i32
    %c0_i32_19 = arith.constant 0 : i32
    %30 = arith.cmpi ne, %29, %c0_i32_19 : i32
    scf.if %30 {
      %c0_20 = arith.constant 0 : index
      %c0_21 = arith.constant 0 : index
      %31 = vector.load %arg6[%c0_20, %c0_21] : memref<16x1xf32, #tpu.memory_space<vmem>>, vector<16x1xf32>
      %c0_22 = arith.constant 0 : index
      %c0_23 = arith.constant 0 : index
      %32 = vector.load %arg7[%c0_22, %c0_23] : memref<16x1xf32, #tpu.memory_space<vmem>>, vector<16x1xf32>
      %33 = math.log %32 : vector<16x1xf32>
      %34 = arith.addf %31, %33 : vector<16x1xf32>
      %c0_24 = arith.constant 0 : index
      %c0_25 = arith.constant 0 : index
      %35 = vector.load %arg5[%c0_24, %c0_25] : memref<16x128xf32, #tpu.memory_space<vmem>>, vector<16x128xf32>
      %36 = vector.broadcast %34 : vector<16x1xf32> to vector<16x128xf32>
      %37 = arith.subf %35, %36 : vector<16x128xf32>
      %c0_26 = arith.constant 0 : index
      %c0_27 = arith.constant 0 : index
      %38 = vector.load %arg5[%c0_26, %c0_27] : memref<16x128xf32, #tpu.memory_space<vmem>>, vector<16x128xf32>
      tpu.vector_store %arg5[%c0_26, %c0_27], %37 {strides = array<i32>} : memref<16x128xf32, #tpu.memory_space<vmem>>, vector<16x128xf32>,
    } else {
    }
    return
  }
  func.func @transform_0(%arg0: i32, %arg1: i32) -> (i32, i32) {
    %c0_i32 = arith.constant 0 : i32
    %c0_i32_0 = arith.constant 0 : i32
    return %arg0, %c0_i32 : i32, i32
  }
  func.func @transform_1(%arg0: i32, %arg1: i32) -> (i32, i32) {
    %c0_i32 = arith.constant 0 : i32
    %c0_i32_0 = arith.constant 0 : i32
    return %c0_i32, %arg1 : i32, i32
  }
  func.func @transform_2(%arg0: i32, %arg1: i32) -> (i32, i32) {
    %c0_i32 = arith.constant 0 : i32
    %c0_i32_0 = arith.constant 0 : i32
    return %c0_i32, %arg1 : i32, i32
  }
  func.func @transform_3(%arg0: i32, %arg1: i32) -> (i32, i32) {
    %c0_i32 = arith.constant 0 : i32
    %c0_i32_0 = arith.constant 0 : i32
    return %arg0, %c0_i32 : i32, i32
  }
}

</mosaic_0001>

<llo_original>
// kernel: projection_layer.1
$region0: #{projection_layer.1}
  #allocation0 [shape = 'u32[]', space=smem, size = 0x4, offset = 0x4, fixed_abs, tag = 'smem constant byte address 0x4 - core index']
  #allocation1 [shape = 'u32[144,128]{1,0:T(1,128)}', space=vmem, size = 0x12000, scoped, tag = 'internal scratch']
  #allocation2 [shape = 'f32[16,1]{1,0:T(8,128)}', space=vmem, size = 0x2000, scoped, tag = 'scratch operand']
  #allocation3 [shape = 'f32[16,1]{1,0:T(8,128)}', space=vmem, size = 0x2000, scoped, tag = 'scratch operand']
  %s0 = inlined_call_operand.vmem [shape: bf16[16,32], index: 0, kind: input, shape index: {}]
  %s1 = inlined_call_operand.vmem [shape: bf16[32,128], index: 1, kind: input, shape index: {}]
  %s2 = inlined_call_operand.vmem [shape: f32[1,128], index: 2, kind: input, shape index: {}]
  %s3 = inlined_call_operand.hbm [shape: f32[16,128], index: 3, kind: output, shape index: {}]
  %s4 = sld [smem:[#allocation0]]
  $region34: #{projection_layer.1} parent=0
    _
  %s6 = ssub.s32 1, %s4
  %s7 = scalar_select 0, %s6, %s4
  $region1: #{projection_layer.1} parent=0
    #allocation4 [shape = 'u8[8192]{0}', space=vmem, size = 0x2000, scoped, tag = 'output window, operand 0, single buffered']
    #allocation5 [shape = 's32[1]{0}', space=sflag, size = 0x4, scoped, tag = 'scoped memory for projection_layer.1']
    %8 = vsyncpa [#allocation5], 0
    // Predicated region
    $region2: #{projection_layer.1} parent=1 // pred_check
      _
    $region3: #{projection_layer.1} parent=1 // pred_check_branch
      %10 = sbr.rel (0) target = $region5
    $region4: #{projection_layer.1} parent=1 // pred_region
      _
    $region5: #{projection_layer.1} parent=1 // pred_fallthru
      _
    // Predicated region
    $region6: #{projection_layer.1} parent=1 // pred_check
      _
    $region7: #{projection_layer.1} parent=1 // pred_check_branch
      %12 = sbr.rel (0) target = $region9
    $region8: #{projection_layer.1} parent=1 // pred_region
      _
    $region9: #{projection_layer.1} parent=1 // pred_fallthru
      _
    // Predicated region
    $region10: #{projection_layer.1} parent=1 // pred_check
      _
    $region11: #{projection_layer.1} parent=1 // pred_check_branch
      %14 = sbr.rel (0) target = $region13
    $region12: #{projection_layer.1} parent=1 // pred_region
      _
    $region13: #{projection_layer.1} parent=1 // pred_fallthru
      _
    %p16 = scmp.eq.s32.totalorder 0, 0
    // Predicated region
    $region14: #{projection_layer.1} parent=1 // pred_check
      %p17 = pneg %p16
    $region15: #{projection_layer.1} parent=1 // pred_check_branch
      %19 = sbr.rel (%p17) target = $region17
    $region16: #{projection_layer.1} parent=1 // pred_region
      %vm20 = vcmask 7168
      %21 = vst.msk [vmem:[#allocation2] sm:$0xff] %vm20, -inf
      %22 = vst.msk [vmem:[#allocation2 + $0x8] sm:$0xff] %vm20, -inf
      %23 = vst.msk [vmem:[#allocation3] sm:$0xff] %vm20, 0.0
      %24 = vst.msk [vmem:[#allocation3 + $0x8] sm:$0xff] %vm20, 0.0
    $region17: #{projection_layer.1} parent=1 // pred_fallthru
      _
    %v25 = vld [vmem:[%s0] sm:$0xf]
    %v26 = vld [vmem:[%s0 + $0x4] sm:$0xf]
    %v27 = vld [vmem:[%s1] sm:$0xf]
    %v28 = vld [vmem:[%s1 + $0x4] sm:$0xf]
    %v29 = vld [vmem:[%s1 + $0x8] sm:$0xf]
    %v30 = vld [vmem:[%s1 + $0xc] sm:$0xf]
    %v31 = vld [vmem:[%s2] sm:$0x1]
    %v33 = vlaneseq
    %v34 = vshrl.u32 %v33, 7
    %v35 = vsub.s32 0, %v34
    %v36 = vrot.slane %v31, %v35
    %v40 = vunpack.c.l.b16 %v25
    %v41 = vunpack.c.l.b16 %v26
    %v42 = vpack.c.b16 %v41, %v40
    %v47 = vunpack.c.l.b16 %v27
    %v48 = vunpack.c.l.b16 %v28
    %v49 = vunpack.c.l.b16 %v29
    %v50 = vunpack.c.l.b16 %v30
    %v51 = vpack.c.b16 %v48, %v47
    %v52 = vpack.c.b16 %v50, %v49
    %vm55 = vcmask 261120
    %v57 = vsel %vm55, %v42, 0
    %59 = vmatprep.subr.bf16.mxu0 0
    %60 = vmatpush1.bf16.msra.mxu0 0
    %61 = vmatprep.subr.bf16.mxu0 0
    %62 = vmatpush1.bf16.msra.mxu0 0
    %63 = vmatprep.subr.bf16.mxu0 0
    %64 = vmatpush1.bf16.msra.mxu0 0
    %65 = vmatprep.subr.bf16.mxu0 0
    %66 = vmatpush1.bf16.msra.mxu0 0
    %67 = vmatprep.subr.bf16.mxu0 0
    %68 = vmatpush1.bf16.msra.mxu0 0
    %69 = vmatprep.subr.bf16.mxu0 0
    %70 = vmatpush1.bf16.msra.mxu0 0
    %71 = vmatprep.subr.bf16.mxu0 0
    %72 = vmatpush1.bf16.msra.mxu0 %v52
    %73 = vmatprep.subr.bf16.mxu0 0
    %74 = vmatpush1.bf16.msra.mxu0 %v51
    %75 = vmatprep.subr.bf16.mxu0 0
    %76 = vmatpush2.bf16.msra.mxu0 0
    %77 = vmatprep.subr.bf16.mxu0 0
    %78 = vmatpush2.bf16.msra.mxu0 0
    %79 = vmatprep.subr.bf16.mxu0 0
    %80 = vmatpush2.bf16.msra.mxu0 0
    %81 = vmatprep.subr.bf16.mxu0 0
    %82 = vmatpush2.bf16.msra.mxu0 0
    %83 = vmatprep.subr.bf16.mxu0 0
    %84 = vmatpush2.bf16.msra.mxu0 0
    %85 = vmatprep.subr.bf16.mxu0 0
    %86 = vmatpush2.bf16.msra.mxu0 0
    %87 = vmatprep.subr.bf16.mxu0 0
    %88 = vmatpush2.bf16.msra.mxu0 0
    %89 = vmatprep.subr.bf16.mxu0 0
    %90 = vmatpush2.bf16.msra.mxu0 0
    %91 = vmatprep.mubr.bf16.mxu0 0
    %92 = vmatmul.mubr.bf16.gmra.mxu0 %v57
    %v93 = vpop.f32.mrf.mxu0
    %v94 = vadd.f32 %v36, %v93
    %v95 = vpop.f32.mrf.mxu0
    %v96 = vpop.f32.mrf.mxu0
    %v97 = vadd.f32 %v36, %v96
    %v98 = vpop.f32.mrf.mxu0
    %99 = vdwg.mxu0
    // Predicated region
    $region18: #{projection_layer.1} parent=1 // pred_check
      %p100 = pneg %p16
    $region19: #{projection_layer.1} parent=1 // pred_check_branch
      %102 = sbr.rel (%p100) target = $region21
    $region20: #{projection_layer.1} parent=1 // pred_region
      %103 = vst [vmem:[#allocation4] sm:$0xff] %v94
      %104 = vst [vmem:[#allocation4 + $0x8] sm:$0xff] %v97
    $region21: #{projection_layer.1} parent=1 // pred_fallthru
      _
    %v105 = vld [vmem:[#allocation2] sm:$0xff]
    %v106 = vld [vmem:[#allocation2 + $0x8] sm:$0xff]
    %107 = vmax.xlane.f32.xlu0 %v94
    %v108 = vpop.xlane.xlu0 %107
    %109 = vmax.xlane.f32.xlu0 %v97
    %v110 = vpop.xlane.xlu0 %109
    %v111 = vmax.f32 %v105, %v108
    %v112 = vmax.f32 %v106, %v110
    %v113 = vld [vmem:[#allocation3] sm:$0xff]
    %v114 = vld [vmem:[#allocation3 + $0x8] sm:$0xff]
    %v115 = vsub.f32 %v105, %v111
    %v116 = vsub.f32 %v106, %v112
    %v117 = vmul.f32 %v115, 1.442695
    %v118 = vpow.pop %v117
    %v119 = vmul.f32 %v116, 1.442695
    %v120 = vpow.pop %v119
    %v121 = vmul.f32 %v113, %v118
    %v122 = vmul.f32 %v114, %v120
    %124 = vset.pattern.permute.xlu0 0
    %125 = vperm.xlu0 %124, %v111
    %v126 = vpop.permute.xlu0 %125
    %129 = vset.pattern.permute.xlu0 0
    %130 = vperm.xlu0 %129, %v112
    %v131 = vpop.permute.xlu0 %130
    %v133 = vsub.f32 %v94, %v126
    %v134 = vsub.f32 %v97, %v131
    %v135 = vmul.f32 %v133, 1.442695
    %v136 = vpow.pop %v135
    %v137 = vmul.f32 %v134, 1.442695
    %v138 = vpow.pop %v137
    %139 = vadd.xlane.f32.xlu0 %v136
    %v140 = vpop.xlane.xlu0 %139
    %141 = vadd.xlane.f32.xlu0 %v138
    %v142 = vpop.xlane.xlu0 %141
    %v143 = vadd.f32 %v121, %v140
    %v144 = vadd.f32 %v122, %v142
    %vm145 = vcmask 7168
    %146 = vst.msk [vmem:[#allocation3] sm:$0xff] %vm145, %v143
    %147 = vst.msk [vmem:[#allocation3 + $0x8] sm:$0xff] %vm145, %v144
    %148 = vst.msk [vmem:[#allocation2] sm:$0xff] %vm145, %v111
    %149 = vst.msk [vmem:[#allocation2 + $0x8] sm:$0xff] %vm145, %v112
    // Predicated region
    $region22: #{projection_layer.1} parent=1 // pred_check
      %p150 = pneg %p16
    $region23: #{projection_layer.1} parent=1 // pred_check_branch
      %152 = sbr.rel (%p150) target = $region25
    $region24: #{projection_layer.1} parent=1 // pred_region
      %v153 = vld [vmem:[#allocation2] sm:$0xff]
      %v154 = vld [vmem:[#allocation2 + $0x8] sm:$0xff]
      %v155 = vld [vmem:[#allocation3] sm:$0xff]
      %v156 = vld [vmem:[#allocation3 + $0x8] sm:$0xff]
      %v157 = vlog2.pop %v155
      %v158 = vmul.f32 %v157, 0.6931472
      %v159 = vlog2.pop %v156
      %v160 = vmul.f32 %v159, 0.6931472
      %v161 = vadd.f32 %v153, %v158
      %v162 = vadd.f32 %v154, %v160
      %v163 = vld [vmem:[#allocation4] sm:$0xff]
      %v164 = vld [vmem:[#allocation4 + $0x8] sm:$0xff]
      %166 = vset.pattern.permute.xlu0 0
      %167 = vperm.xlu0 %166, %v161
      %v168 = vpop.permute.xlu0 %167
      %171 = vset.pattern.permute.xlu0 0
      %172 = vperm.xlu0 %171, %v162
      %v173 = vpop.permute.xlu0 %172
      %v175 = vsub.f32 %v163, %v168
      %v176 = vsub.f32 %v164, %v173
      %177 = vst [vmem:[#allocation4] sm:$0xff] %v175
      %178 = vst [vmem:[#allocation4 + $0x8] sm:$0xff] %v176
    $region25: #{projection_layer.1} parent=1 // pred_fallthru
      _
    // Predicated region
    $region26: #{projection_layer.1} parent=1 // pred_check
      _
    $region27: #{projection_layer.1} parent=1 // pred_check_branch
      %180 = sbr.rel (0) target = $region29
    $region28: #{projection_layer.1} parent=1 // pred_region
      %s182 = ssub.s32 256, 256
      %183 = vsyncadd [#allocation5], %s182
      %s184 = sshll.u32 [#allocation4], 4
      %s185 = int_to_ptr.vmem [resolvable:$true] %s184
      %190 = dma.vmem_to_hbm [thread:$0]  %s185, 256, %s3, [#allocation5], 128, 128, 8
    $region29: #{projection_layer.1} parent=1 // pred_fallthru
      _
    // Predicated region
    $region30: #{projection_layer.1} parent=1 // pred_check
      _
    $region31: #{projection_layer.1} parent=1 // pred_check_branch
      %192 = sbr.rel (0) target = $region33
    $region32: #{projection_layer.1} parent=1 // pred_region
      %193 = dma.done [#allocation5], 256
    $region33: #{projection_layer.1} parent=1 // pred_fallthru
      _
    %194 = vsyncpa [#allocation5], 1

</llo_original>
